<compile_context>
chip_gen: v6e
topology: v6e:2x2x1
jax: 0.10.0
libtpu: 0.0.40
codegen_flags: <defaults>
</compile_context>

<pallas_src>
import jax
import jax.numpy as jnp
from jax.experimental import pallas as pl
from jax.experimental.pallas import tpu as pltpu


def _round_up(x, m):
    return ((x + m - 1) // m) * m


def _spatial_se_kernel(x_ref, w1_ref, b1_ref, w2_ref, b2_ref, o_ref):
    # x_ref : (tm, Wp)        packed rows, lane-dense (Wp = pack*C, ideally 128)
    # w1_ref: (Wp, Hp)        block-diagonal fc1 weight (in, out), Hp = pack*Cr
    # b1_ref: (1, Hp)         fc1 bias tiled per packed position (f32)
    # w2_ref: (Hp, Wp)        block-diagonal fc2 weight (in, out)
    # b2_ref: (1, Wp)         fc2 bias tiled per packed position (f32)
    # o_ref : (tm, Wp)
    x = x_ref[...]

    # fc1 + relu (MXU, f32 accumulation; bias-add/relu stay f32 on every gen)
    h = jnp.dot(x, w1_ref[...], preferred_element_type=jnp.float32) + b1_ref[...]
    h = jnp.maximum(h, 0.0)

    # fc2 + sigmoid
    g = jnp.dot(h.astype(w2_ref.dtype), w2_ref[...],
                preferred_element_type=jnp.float32) + b2_ref[...]
    g = jax.nn.sigmoid(g)

    # gate and store a lane-dense 128-wide block
    o_ref[...] = (x.astype(jnp.float32) * g).astype(o_ref.dtype)


def spatial_se(x, w1, b1, w2, b2, *, tm=2048):
    """Channel-last SpatialSE:  x * sigmoid(fc2(relu(fc1(x)))).

    x: (..., C).  w1: (C, Cr), b1: (Cr,), w2: (Cr, C), b2: (C,)
    (Linear weights stored (in, out), i.e. the transpose of PyTorch's layout.)
    """
    orig_shape = x.shape
    C = orig_shape[-1]
    Cr = w1.shape[1]
    cdt = x.dtype  # compute/storage dtype for activations & weights

    # Lane-dense packing: put `pack` positions side by side so the last dim is
    # 128 lanes wide (unmasked stores, 4x more useful data per vld/vst/DMA).
    pack = (128 // C) if (C < 128 and 128 % C == 0) else 1
    Wp = pack * C
    Hp = pack * Cr

    x2 = x.reshape(-1, C)
    N = x2.shape[0]

    # Row-tile sizing: big tiles amortize the ~0.35us/step overhead; keep the
    # grid >= 2 parallel steps when possible (megacore / v7x's 2 TCs); align
    # to the 8-sublane granularity; pad the row tail (cdiv grid, no asserts).
    Np = pl.cdiv(N, pack)                                  # packed rows needed
    tm_cap = max(8, _round_up(pl.cdiv(Np, 2), 8))
    tm_eff = max(8, min(_round_up(tm, 8), tm_cap))
    Np_pad = _round_up(Np, tm_eff)
    grid = Np_pad // tm_eff

    pad_rows = Np_pad * pack - N
    if pad_rows:
        x2 = jnp.pad(x2, ((0, pad_rows), (0, 0)))          # zero rows -> gated to 0
    xp = x2.reshape(Np_pad, Wp)

    # Pre-pack parameters once in the wrapper: zero-padded block-diagonal
    # weights (so packed positions never mix), biases tiled `pack` times.
    def block_diag(w):
        i, o = w.shape
        eye = jnp.eye(pack, dtype=w.dtype)
        return (eye[:, None, :, None] * w[None, :, None, :]).reshape(pack * i, pack * o)

    w1p = block_diag(w1).astype(cdt)                       # (Wp, Hp)
    w2p = block_diag(w2).astype(cdt)                       # (Hp, Wp)
    b1p = jnp.tile(b1.astype(jnp.float32), pack).reshape(1, Hp)
    b2p = jnp.tile(b2.astype(jnp.float32), pack).reshape(1, Wp)

    # VMEM budget: double-buffered in/out blocks + tiny resident weights + slack.
    blk = tm_eff * Wp * xp.dtype.itemsize
    vmem_bytes = int(min(32 * 1024 * 1024, max(16 * 1024 * 1024, 8 * blk)))

    out = pl.pallas_call(
        _spatial_se_kernel,
        out_shape=jax.ShapeDtypeStruct((Np_pad, Wp), x.dtype),
        grid_spec=pltpu.PrefetchScalarGridSpec(
            num_scalar_prefetch=0,
            grid=(grid,),
            in_specs=[
                pl.BlockSpec((tm_eff, Wp), lambda i: (i, 0)),   # packed x rows
                pl.BlockSpec((Wp, Hp), lambda i: (0, 0)),       # fc1 weight (resident)
                pl.BlockSpec((1, Hp), lambda i: (0, 0)),        # fc1 bias
                pl.BlockSpec((Hp, Wp), lambda i: (0, 0)),       # fc2 weight (resident)
                pl.BlockSpec((1, Wp), lambda i: (0, 0)),        # fc2 bias
            ],
            out_specs=pl.BlockSpec((tm_eff, Wp), lambda i: (i, 0)),
        ),
        compiler_params=pltpu.CompilerParams(
            dimension_semantics=("parallel",),
            vmem_limit_bytes=vmem_bytes),
    )(xp, w1p, b1p, w2p, b2p)

    out = out.reshape(Np_pad * pack, C)[:N]
    return out.reshape(orig_shape)


def _ref_spatial_se(x, w1, b1, w2, b2):
    xf = x.astype(jnp.float32)
    h = jnp.maximum(xf @ w1.astype(jnp.float32) + b1.astype(jnp.float32), 0.0)
    g = jax.nn.sigmoid(h @ w2.astype(jnp.float32) + b2.astype(jnp.float32))
    return (xf * g).astype(x.dtype)


if __name__ == "__main__":
    # Module config: ch=32, r=8  ->  hidden = ch // r = 4
    ch, r = 32, 8
    hidden = ch // r

    key = jax.random.PRNGKey(0)
    kx, kw1, kb1, kw2, kb2, kx2 = jax.random.split(key, 6)

    # Channel-last input (batch=2, spatial 16x16, channels=32)
    x = jax.random.normal(kx, (2, 16, 16, ch), dtype=jnp.float32)

    # Parameters stored (in, out) — equivalent to PyTorch's (out, in) transposed.
    w1 = jax.random.normal(kw1, (ch, hidden), dtype=jnp.float32) * 0.1
    b1 = jax.random.normal(kb1, (hidden,), dtype=jnp.float32) * 0.1
    w2 = jax.random.normal(kw2, (hidden, ch), dtype=jnp.float32) * 0.1
    b2 = jax.random.normal(kb2, (ch,), dtype=jnp.float32) * 0.1

    out = jax.block_until_ready(spatial_se(x, w1, b1, w2, b2))
    ref = _ref_spatial_se(x.reshape(-1, ch), w1, b1, w2, b2).reshape(x.shape)
    assert jnp.allclose(out, ref, atol=2e-5, rtol=1e-5), "mismatch vs reference"

    # Ragged row count (3*7*5 = 105 rows): exercises the cdiv + tail-pad path.
    x_odd = jax.random.normal(kx2, (3, 7, 5, ch), dtype=jnp.float32)
    out_odd = jax.block_until_ready(spatial_se(x_odd, w1, b1, w2, b2))
    ref_odd = _ref_spatial_se(x_odd.reshape(-1, ch), w1, b1, w2, b2).reshape(x_odd.shape)
    assert jnp.allclose(out_odd, ref_odd, atol=2e-5, rtol=1e-5), "mismatch (ragged) vs reference"

    print("KERNEL_OK")
</pallas_src>

<mosaic_0001>
module attributes {stable_mosaic.version = 11 : i64} {
  func.func @_spatial_se_kernel(%arg0: i32, %arg1: memref<64x128xf32, #tpu.memory_space<vmem>>, %arg2: memref<128x16xf32, #tpu.memory_space<vmem>>, %arg3: memref<1x16xf32, #tpu.memory_space<vmem>>, %arg4: memref<16x128xf32, #tpu.memory_space<vmem>>, %arg5: memref<1x128xf32, #tpu.memory_space<vmem>>, %arg6: memref<64x128xf32, #tpu.memory_space<vmem>>) attributes {dimension_semantics = [#tpu.dimension_semantics<parallel>], iteration_bounds = array<i64: 2>, scalar_prefetch = 0 : i64, scratch_operands = 0 : i64, tpu.core_type = #tpu.core_type<tc>, window_params = [{transform_indices = @transform_0, window_bounds = array<i64: 64, 128>}, {pipeline_mode = #tpu.pipeline_mode<synchronous>, transform_indices = @transform_1, window_bounds = array<i64: 128, 16>}, {pipeline_mode = #tpu.pipeline_mode<synchronous>, transform_indices = @transform_2, window_bounds = array<i64: 1, 16>}, {pipeline_mode = #tpu.pipeline_mode<synchronous>, transform_indices = @transform_3, window_bounds = array<i64: 16, 128>}, {pipeline_mode = #tpu.pipeline_mode<synchronous>, transform_indices = @transform_4, window_bounds = array<i64: 1, 128>}, {transform_indices = @transform_5, window_bounds = array<i64: 64, 128>}]} {
    %c0 = arith.constant 0 : index
    %c0_0 = arith.constant 0 : index
    %0 = vector.load %arg1[%c0, %c0_0] : memref<64x128xf32, #tpu.memory_space<vmem>>, vector<64x128xf32>
    %c0_1 = arith.constant 0 : index
    %c0_2 = arith.constant 0 : index
    %1 = vector.load %arg2[%c0_1, %c0_2] : memref<128x16xf32, #tpu.memory_space<vmem>>, vector<128x16xf32>
    %cst = arith.constant dense<0.000000e+00> : vector<64x16xf32>
    %2 = tpu.matmul %0, %1, %cst {dimension_numbers = #tpu.dot_dimension_numbers<[1], [0], [0], [1], [0, 0, 1, 1], [], []>} : vector<64x128xf32>, vector<128x16xf32>, vector<64x16xf32> -> vector<64x16xf32>
    %c0_3 = arith.constant 0 : index
    %c0_4 = arith.constant 0 : index
    %3 = vector.load %arg3[%c0_3, %c0_4] : memref<1x16xf32, #tpu.memory_space<vmem>>, vector<1x16xf32>
    %4 = vector.broadcast %3 : vector<1x16xf32> to vector<64x16xf32>
    %5 = arith.addf %2, %4 : vector<64x16xf32>
    %cst_5 = arith.constant 0.000000e+00 : f32
    %6 = vector.broadcast %cst_5 : f32 to vector<64x16xf32>
    %7 = arith.maximumf %5, %6 : vector<64x16xf32>
    %c0_6 = arith.constant 0 : index
    %c0_7 = arith.constant 0 : index
    %8 = vector.load %arg4[%c0_6, %c0_7] : memref<16x128xf32, #tpu.memory_space<vmem>>, vector<16x128xf32>
    %cst_8 = arith.constant dense<0.000000e+00> : vector<64x128xf32>
    %9 = tpu.matmul %7, %8, %cst_8 {dimension_numbers = #tpu.dot_dimension_numbers<[1], [0], [0], [1], [0, 0, 1, 1], [], []>} : vector<64x16xf32>, vector<16x128xf32>, vector<64x128xf32> -> vector<64x128xf32>
    %c0_9 = arith.constant 0 : index
    %c0_10 = arith.constant 0 : index
    %10 = vector.load %arg5[%c0_9, %c0_10] : memref<1x128xf32, #tpu.memory_space<vmem>>, vector<1x128xf32>
    %11 = vector.broadcast %10 : vector<1x128xf32> to vector<64x128xf32>
    %12 = arith.addf %9, %11 : vector<64x128xf32>
    %13 = arith.negf %12 : vector<64x128xf32>
    %14 = math.exp %13 : vector<64x128xf32>
    %cst_11 = arith.constant 1.000000e+00 : f32
    %15 = vector.broadcast %cst_11 : f32 to vector<64x128xf32>
    %16 = arith.addf %15, %14 : vector<64x128xf32>
    %17 = arith.divf %15, %16 : vector<64x128xf32>
    %18 = arith.mulf %0, %17 : vector<64x128xf32>
    %c0_12 = arith.constant 0 : index
    %c0_13 = arith.constant 0 : index
    %19 = vector.load %arg6[%c0_12, %c0_13] : memref<64x128xf32, #tpu.memory_space<vmem>>, vector<64x128xf32>
    tpu.vector_store %arg6[%c0_12, %c0_13], %18 {strides = array<i32>} : memref<64x128xf32, #tpu.memory_space<vmem>>, vector<64x128xf32>,
    return
  }
  func.func @transform_0(%arg0: i32) -> (i32, i32) {
    %c0_i32 = arith.constant 0 : i32
    %c0_i32_0 = arith.constant 0 : i32
    return %arg0, %c0_i32 : i32, i32
  }
  func.func @transform_1(%arg0: i32) -> (i32, i32) {
    %c0_i32 = arith.constant 0 : i32
    %c0_i32_0 = arith.constant 0 : i32
    %c0_i32_1 = arith.constant 0 : i32
    return %c0_i32, %c0_i32_0 : i32, i32
  }
  func.func @transform_2(%arg0: i32) -> (i32, i32) {
    %c0_i32 = arith.constant 0 : i32
    %c0_i32_0 = arith.constant 0 : i32
    %c0_i32_1 = arith.constant 0 : i32
    return %c0_i32, %c0_i32_0 : i32, i32
  }
  func.func @transform_3(%arg0: i32) -> (i32, i32) {
    %c0_i32 = arith.constant 0 : i32
    %c0_i32_0 = arith.constant 0 : i32
    %c0_i32_1 = arith.constant 0 : i32
    return %c0_i32, %c0_i32_0 : i32, i32
  }
  func.func @transform_4(%arg0: i32) -> (i32, i32) {
    %c0_i32 = arith.constant 0 : i32
    %c0_i32_0 = arith.constant 0 : i32
    %c0_i32_1 = arith.constant 0 : i32
    return %c0_i32, %c0_i32_0 : i32, i32
  }
  func.func @transform_5(%arg0: i32) -> (i32, i32) {
    %c0_i32 = arith.constant 0 : i32
    %c0_i32_0 = arith.constant 0 : i32
    return %arg0, %c0_i32 : i32, i32
  }
}

</mosaic_0001>

<llo_original>
// kernel: tpu_custom_call.1
$region0: #{tpu_custom_call.1}
  #allocation0 [shape = 'u32[]', space=smem, size = 0x4, offset = 0x4, fixed_abs, tag = 'smem constant byte address 0x4 - core index']
  #allocation1 [shape = 'u32[144,128]{1,0:T(1,128)}', space=vmem, size = 0x12000, scoped, tag = 'internal scratch']
  %s0 = inlined_call_operand.vmem [shape: f32[128,128], index: 0, kind: input, shape index: {}]
  %s1 = inlined_call_operand.vmem [shape: f32[128,16], index: 1, kind: input, shape index: {}]
  %s2 = inlined_call_operand.vmem [shape: f32[1,16], index: 2, kind: input, shape index: {}]
  %s3 = inlined_call_operand.vmem [shape: f32[16,128], index: 3, kind: input, shape index: {}]
  %s4 = inlined_call_operand.vmem [shape: f32[1,128], index: 4, kind: input, shape index: {}]
  %s5 = inlined_call_operand.hbm [shape: f32[128,128], index: 5, kind: output, shape index: {}]
  %s6 = sld [smem:[#allocation0]]
  $region53: #{tpu_custom_call.1} parent=0
    _
  %s8 = ssub.s32 1, %s6
  %s9 = scalar_select 0, %s8, %s6
  $region1: #{tpu_custom_call.1} parent=0
    #allocation2 [shape = 'u8[65536]{0}', space=vmem, size = 0x10000, scoped, tag = 'output window, operand 0']
    #allocation3 [shape = 's32[2]{0}', space=sflag, size = 0x8, scoped, tag = 'scoped memory for tpu_custom_call.1']
    %10 = vsyncpa [#allocation3], 0
    %s11 = scalar_lea.sflag [#allocation3], 1
    %12 = vsyncpa %s11, 0
    loop: start=0, step=1, limit=4
    $region2: #{tpu_custom_call.1} parent=1 // loop_pre_header
      _
    $region3: #{tpu_custom_call.1} parent=1 // loop_header
      %s14 = sphi 0, %s18
      %p15 = scmp.ge.s32.totalorder %s14, 4
      %s24 = sphi 0, %s26
      %s27 = sphi 0, %s24
      %s28 = sphi 0, %s27
      %s44 = sphi 0, %s28
      %s48 = sphi 0, %s48
      %s50 = sphi 0, %s48
      %s51 = sphi 0, %s50
      %s65 = sphi 0, %s51
      %s69 = sphi 0, %s69
      %s71 = sphi 0, %s69
      %s72 = sphi 0, %s71
      %s86 = sphi 0, %s72
      %s90 = sphi 0, %s90
      %s92 = sphi 0, %s90
      %s93 = sphi 0, %s92
      %s107 = sphi 0, %s93
      %s111 = sphi 0, %s111
      %s113 = sphi 0, %s111
      %s114 = sphi 0, %s113
      %s128 = sphi 0, %s114
      %s134 = sphi 0, %s136
      %s137 = sphi 0, %s134
      %s138 = sphi 0, %s137
      %s154 = sphi 0, %s138
    $region4: #{tpu_custom_call.1} parent=1 // loop_header_branch
      %17 = sbr.rel (%p15) target = $region8
    $region5: #{tpu_custom_call.1} parent=1 // loop_body
      %s19 = ssub.s32 %s14, 1
      %s20 = ssub.s32 %s14, 2
      %s21 = sadd.s32 %s14, 1
      %s22 = ssub.s32 %s14, %s21
      %p23 = scmp.eq.s32.totalorder %s22, 0
      %s25 = sadd.s32 %s24, 1
      %s26 = scalar_select %p23, %s24, %s25
      %p29 = pneg %p23
      %p30 = scmp.eq.s32.totalorder %s14, 1
      %p31 = por %p29, %p30
      %p32 = scmp.ne.s32.totalorder %s24, %s27
      %p33 = scmp.eq.s32.totalorder %s14, 0
      %p34 = por %p32, %p33
      %p35 = scmp.ne.s32.totalorder %s24, %s27
      %p36 = scmp.eq.s32.totalorder %s19, 1
      %p37 = por %p35, %p36
      %p38 = scmp.ne.s32.totalorder %s27, %s28
      %p39 = scmp.eq.s32.totalorder %s19, 0
      %p40 = por %p38, %p39
      %p41 = scmp.ne.s32.totalorder %s27, %s28
      %p42 = scmp.eq.s32.totalorder %s20, 1
      %p43 = por %p41, %p42
      %p45 = scmp.ne.s32.totalorder %s28, %s44
      %p46 = scmp.eq.s32.totalorder %s20, 0
      %p47 = por %p45, %p46
      %s49 = sadd.s32 %s48, 1
      %p52 = scmp.eq.s32.totalorder %s14, 1
      %p53 = scmp.ne.s32.totalorder %s48, %s50
      %p54 = scmp.eq.s32.totalorder %s14, 0
      %p55 = por %p53, %p54
      %p56 = scmp.ne.s32.totalorder %s48, %s50
      %p57 = scmp.eq.s32.totalorder %s19, 1
      %p58 = por %p56, %p57
      %p59 = scmp.ne.s32.totalorder %s50, %s51
      %p60 = scmp.eq.s32.totalorder %s19, 0
      %p61 = por %p59, %p60
      %p62 = scmp.ne.s32.totalorder %s50, %s51
      %p63 = scmp.eq.s32.totalorder %s20, 1
      %p64 = por %p62, %p63
      %p66 = scmp.ne.s32.totalorder %s51, %s65
      %p67 = scmp.eq.s32.totalorder %s20, 0
      %p68 = por %p66, %p67
      %s70 = sadd.s32 %s69, 1
      %p73 = scmp.eq.s32.totalorder %s14, 1
      %p74 = scmp.ne.s32.totalorder %s69, %s71
      %p75 = scmp.eq.s32.totalorder %s14, 0
      %p76 = por %p74, %p75
      %p77 = scmp.ne.s32.totalorder %s69, %s71
      %p78 = scmp.eq.s32.totalorder %s19, 1
      %p79 = por %p77, %p78
      %p80 = scmp.ne.s32.totalorder %s71, %s72
      %p81 = scmp.eq.s32.totalorder %s19, 0
      %p82 = por %p80, %p81
      %p83 = scmp.ne.s32.totalorder %s71, %s72
      %p84 = scmp.eq.s32.totalorder %s20, 1
      %p85 = por %p83, %p84
      %p87 = scmp.ne.s32.totalorder %s72, %s86
      %p88 = scmp.eq.s32.totalorder %s20, 0
      %p89 = por %p87, %p88
      %s91 = sadd.s32 %s90, 1
      %p94 = scmp.eq.s32.totalorder %s14, 1
      %p95 = scmp.ne.s32.totalorder %s90, %s92
      %p96 = scmp.eq.s32.totalorder %s14, 0
      %p97 = por %p95, %p96
      %p98 = scmp.ne.s32.totalorder %s90, %s92
      %p99 = scmp.eq.s32.totalorder %s19, 1
      %p100 = por %p98, %p99
      %p101 = scmp.ne.s32.totalorder %s92, %s93
      %p102 = scmp.eq.s32.totalorder %s19, 0
      %p103 = por %p101, %p102
      %p104 = scmp.ne.s32.totalorder %s92, %s93
      %p105 = scmp.eq.s32.totalorder %s20, 1
      %p106 = por %p104, %p105
      %p108 = scmp.ne.s32.totalorder %s93, %s107
      %p109 = scmp.eq.s32.totalorder %s20, 0
      %p110 = por %p108, %p109
      %s112 = sadd.s32 %s111, 1
      %p115 = scmp.eq.s32.totalorder %s14, 1
      %p116 = scmp.ne.s32.totalorder %s111, %s113
      %p117 = scmp.eq.s32.totalorder %s14, 0
      %p118 = por %p116, %p117
      %p119 = scmp.ne.s32.totalorder %s111, %s113
      %p120 = scmp.eq.s32.totalorder %s19, 1
      %p121 = por %p119, %p120
      %p122 = scmp.ne.s32.totalorder %s113, %s114
      %p123 = scmp.eq.s32.totalorder %s19, 0
      %p124 = por %p122, %p123
      %p125 = scmp.ne.s32.totalorder %s113, %s114
      %p126 = scmp.eq.s32.totalorder %s20, 1
      %p127 = por %p125, %p126
      %p129 = scmp.ne.s32.totalorder %s114, %s128
      %p130 = scmp.eq.s32.totalorder %s20, 0
      %p131 = por %p129, %p130
      %s132 = ssub.s32 %s14, %s21
      %p133 = scmp.eq.s32.totalorder %s132, 0
      %s135 = sadd.s32 %s134, 1
      %s136 = scalar_select %p133, %s134, %s135
      %p139 = pneg %p133
      %p140 = scmp.eq.s32.totalorder %s14, 1
      %p141 = por %p139, %p140
      %p142 = scmp.ne.s32.totalorder %s134, %s137
      %p143 = scmp.eq.s32.totalorder %s14, 0
      %p144 = por %p142, %p143
      %p145 = scmp.ne.s32.totalorder %s134, %s137
      %p146 = scmp.eq.s32.totalorder %s19, 1
      %p147 = por %p145, %p146
      %p148 = scmp.ne.s32.totalorder %s137, %s138
      %p149 = scmp.eq.s32.totalorder %s19, 0
      %p150 = por %p148, %p149
      %p151 = scmp.ne.s32.totalorder %s137, %s138
      %p152 = scmp.eq.s32.totalorder %s20, 1
      %p153 = por %p151, %p152
      %p155 = scmp.ne.s32.totalorder %s138, %s154
      %p156 = scmp.eq.s32.totalorder %s20, 0
      %p157 = por %p155, %p156
      %p158 = scmp.le.s32.totalorder 1, %s14
      %p159 = scmp.lt.s32.totalorder %s14, 3
      %p160 = pnand %p158, %p159
      %p161 = pneg %p160
      // Predicated region
      $region9: #{tpu_custom_call.1} parent=5 // pred_check
        _
      $region10: #{tpu_custom_call.1} parent=5 // pred_check_branch
        %163 = sbr.rel (%p160) target = $region12
      $region11: #{tpu_custom_call.1} parent=5 // pred_region
        %s164 = ssub.s32 %s14, 1
        // Predicated region
        $region13: #{tpu_custom_call.1} parent=11 // pred_check
          %p165 = pneg %p61
        $region14: #{tpu_custom_call.1} parent=11 // pred_check_branch
          %167 = sbr.rel (%p165) target = $region16
        $region15: #{tpu_custom_call.1} parent=11 // pred_region
          _
        $region16: #{tpu_custom_call.1} parent=11 // pred_fallthru
          _
        // Predicated region
        $region17: #{tpu_custom_call.1} parent=11 // pred_check
          %p168 = pneg %p82
        $region18: #{tpu_custom_call.1} parent=11 // pred_check_branch
          %170 = sbr.rel (%p168) target = $region20
        $region19: #{tpu_custom_call.1} parent=11 // pred_region
          _
        $region20: #{tpu_custom_call.1} parent=11 // pred_fallthru
          _
        // Predicated region
        $region21: #{tpu_custom_call.1} parent=11 // pred_check
          %p171 = pneg %p103
        $region22: #{tpu_custom_call.1} parent=11 // pred_check_branch
          %173 = sbr.rel (%p171) target = $region24
        $region23: #{tpu_custom_call.1} parent=11 // pred_region
          _
        $region24: #{tpu_custom_call.1} parent=11 // pred_fallthru
          _
        // Predicated region
        $region25: #{tpu_custom_call.1} parent=11 // pred_check
          %p174 = pneg %p124
        $region26: #{tpu_custom_call.1} parent=11 // pred_check_branch
          %176 = sbr.rel (%p174) target = $region28
        $region27: #{tpu_custom_call.1} parent=11 // pred_region
          _
        $region28: #{tpu_custom_call.1} parent=11 // pred_fallthru
          _
      $region12: #{tpu_custom_call.1} parent=5 // pred_fallthru
        _
      %p177 = scmp.lt.s32.totalorder %s14, 2
      // Predicated region
      $region29: #{tpu_custom_call.1} parent=5 // pred_check
        %p178 = pneg %p177
      $region30: #{tpu_custom_call.1} parent=5 // pred_check_branch
        %180 = sbr.rel (%p178) target = $region32
      $region31: #{tpu_custom_call.1} parent=5 // pred_region
        // Predicated region
        $region33: #{tpu_custom_call.1} parent=31 // pred_check
          %p181 = pneg %p34
        $region34: #{tpu_custom_call.1} parent=31 // pred_check_branch
          %183 = sbr.rel (%p181) target = $region36
        $region35: #{tpu_custom_call.1} parent=31 // pred_region
          %s184 = smul.u32 8, %s14
          %p185 = scmp.lt.s32.totalorder %s184, 15
          %s186 = scalar_select %p185, %s184, 15
          %s187 = smul.addr %s186, 8
          %s188 = scalar_lea.vmem %s0, %s187
          %s189 = smul.u32 8, %s14
        $region36: #{tpu_custom_call.1} parent=31 // pred_fallthru
          _
      $region32: #{tpu_custom_call.1} parent=5 // pred_fallthru
        _
      %p190 = scmp.le.s32.totalorder 1, %s14
      %p191 = scmp.lt.s32.totalorder %s14, 3
      %p192 = pnand %p190, %p191
      %p193 = pneg %p192
      // Predicated region
      $region37: #{tpu_custom_call.1} parent=5 // pred_check
        _
      $region38: #{tpu_custom_call.1} parent=5 // pred_check_branch
        %195 = sbr.rel (%p192) target = $region40
      $region39: #{tpu_custom_call.1} parent=5 // pred_region
        %s196 = ssub.s32 %s14, 1
        %s197 = smul.u32 8, %s19
        %p198 = scmp.lt.s32.totalorder %s197, 15
        %s199 = scalar_select %p198, %s197, 15
        %s200 = smul.addr %s199, 8
        %s201 = scalar_lea.vmem %s0, %s200
        %p202 = pneg %p40
        %p203 = pneg %p37
        %p204 = pneg %p61
        %p205 = pneg %p58
        %p206 = pneg %p82
        %p207 = pneg %p79
        %p208 = pneg %p103
        %p209 = pneg %p100
        %p210 = pneg %p124
        %p211 = pneg %p121
        %p212 = pneg %p150
        %p213 = pneg %p147
        %s214 = sand.u32 %s137, 1
        %s215 = scalar_lea.sflag [#allocation3], %s214
        %s216 = sand.u32 %s137, 1
        %s217 = smul.addr %s216, 64
        %s218 = scalar_lea.vmem [#allocation2], %s217
        %s219 = smul.u32 8, %s19
        %p220 = scmp.lt.s32.totalorder %s219, 15
        %s221 = scalar_select %p220, %s219, 15
        %s222 = smul.addr %s221, 8
        %s223 = scalar_lea.vmem %s0, %s222
        %s224 = smul.u32 8, %s19
        %s225 = smul.u32 8, %s19
        %v226 = vld [vmem:[%s223] sm:$0xff]
        %v227 = vld [vmem:[%s223 + $0x8] sm:$0xff]
        %v228 = vld [vmem:[%s223 + $0x10] sm:$0xff]
        %v229 = vld [vmem:[%s223 + $0x18] sm:$0xff]
        %v230 = vld [vmem:[%s223 + $0x20] sm:$0xff]
        %v231 = vld [vmem:[%s223 + $0x28] sm:$0xff]
        %v232 = vld [vmem:[%s223 + $0x30] sm:$0xff]
        %v233 = vld [vmem:[%s223 + $0x38] sm:$0xff]
        %v234 = vld [vmem:[%s1] sm:$0xff]
        %v235 = vld [vmem:[%s1 + $0x8] sm:$0xff]
        %v236 = vld [vmem:[%s1 + $0x10] sm:$0xff]
        %v237 = vld [vmem:[%s1 + $0x18] sm:$0xff]
        %v238 = vld [vmem:[%s1 + $0x20] sm:$0xff]
        %v239 = vld [vmem:[%s1 + $0x28] sm:$0xff]
        %v240 = vld [vmem:[%s1 + $0x30] sm:$0xff]
        %v241 = vld [vmem:[%s1 + $0x38] sm:$0xff]
        %v242 = vld [vmem:[%s1 + $0x40] sm:$0xff]
        %v243 = vld [vmem:[%s1 + $0x48] sm:$0xff]
        %v244 = vld [vmem:[%s1 + $0x50] sm:$0xff]
        %v245 = vld [vmem:[%s1 + $0x58] sm:$0xff]
        %v246 = vld [vmem:[%s1 + $0x60] sm:$0xff]
        %v247 = vld [vmem:[%s1 + $0x68] sm:$0xff]
        %v248 = vld [vmem:[%s1 + $0x70] sm:$0xff]
        %v249 = vld [vmem:[%s1 + $0x78] sm:$0xff]
        %v250 = vld [vmem:[%s2] sm:$0x1]
        %v252 = vlaneseq
        %v253 = vshrl.u32 %v252, 7
        %v254 = vsub.s32 0, %v253
        %v255 = vrot.slane %v250, %v254
        %257 = vmatprep.subr.mxu0 0.0
        %258 = vmatpush1.msra.mxu0 %v249
        %259 = vmatprep.subr.mxu0 0.0
        %260 = vmatpush1.msra.mxu0 %v248
        %261 = vmatprep.subr.mxu0 0.0
        %262 = vmatpush1.msra.mxu0 %v247
        %263 = vmatprep.subr.mxu0 0.0
        %264 = vmatpush1.msra.mxu0 %v246
        %265 = vmatprep.subr.mxu0 0.0
        %266 = vmatpush1.msra.mxu0 %v245
        %267 = vmatprep.subr.mxu0 0.0
        %268 = vmatpush1.msra.mxu0 %v244
        %269 = vmatprep.subr.mxu0 0.0
        %270 = vmatpush1.msra.mxu0 %v243
        %271 = vmatprep.subr.mxu0 0.0
        %272 = vmatpush1.msra.mxu0 %v242
        %273 = vmatprep.subr.mxu0 0.0
        %274 = vmatpush1.msra.mxu0 %v241
        %275 = vmatprep.subr.mxu0 0.0
        %276 = vmatpush1.msra.mxu0 %v240
        %277 = vmatprep.subr.mxu0 0.0
        %278 = vmatpush1.msra.mxu0 %v239
        %279 = vmatprep.subr.mxu0 0.0
        %280 = vmatpush1.msra.mxu0 %v238
        %281 = vmatprep.subr.mxu0 0.0
        %282 = vmatpush1.msra.mxu0 %v237
        %283 = vmatprep.subr.mxu0 0.0
        %284 = vmatpush1.msra.mxu0 %v236
        %285 = vmatprep.subr.mxu0 0.0
        %286 = vmatpush1.msra.mxu0 %v235
        %287 = vmatprep.subr.mxu0 0.0
        %288 = vmatpush1.msra.mxu0 %v234
        %289 = vmatprep.subr.mxu0 0.0
        %290 = vmatpush2.msra.mxu0 0.0
        %291 = vmatprep.subr.mxu0 0.0
        %292 = vmatpush2.msra.mxu0 0.0
        %293 = vmatprep.subr.mxu0 0.0
        %294 = vmatpush2.msra.mxu0 0.0
        %295 = vmatprep.subr.mxu0 0.0
        %296 = vmatpush2.msra.mxu0 0.0
        %297 = vmatprep.subr.mxu0 0.0
        %298 = vmatpush2.msra.mxu0 0.0
        %299 = vmatprep.subr.mxu0 0.0
        %300 = vmatpush2.msra.mxu0 0.0
        %301 = vmatprep.subr.mxu0 0.0
        %302 = vmatpush2.msra.mxu0 0.0
        %303 = vmatprep.subr.mxu0 0.0
        %304 = vmatpush2.msra.mxu0 0.0
        %305 = vmatprep.subr.mxu0 0.0
        %306 = vmatpush2.msra.mxu0 0.0
        %307 = vmatprep.subr.mxu0 0.0
        %308 = vmatpush2.msra.mxu0 0.0
        %309 = vmatprep.subr.mxu0 0.0
        %310 = vmatpush2.msra.mxu0 0.0
        %311 = vmatprep.subr.mxu0 0.0
        %312 = vmatpush2.msra.mxu0 0.0
        %313 = vmatprep.subr.mxu0 0.0
        %314 = vmatpush2.msra.mxu0 0.0
        %315 = vmatprep.subr.mxu0 0.0
        %316 = vmatpush2.msra.mxu0 0.0
        %317 = vmatprep.subr.mxu0 0.0
        %318 = vmatpush2.msra.mxu0 0.0
        %319 = vmatprep.subr.mxu0 0.0
        %320 = vmatpush2.msra.mxu0 0.0
        %321 = vmatprep.mubr.f32.mxu0 0.0
        %322 = vmatmul.mubr.f32.gmra.mxu0 %v226
        %v323 = vpop.f32.mrf.mxu0
        %v324 = vadd.f32 %v255, %v323
        %v325 = vpop.f32.mrf.mxu0
        %326 = vmatprep.mubr.f32.mxu0 0.0
        %327 = vmatmul.mubr.f32.gmra.mxu0 %v227
        %v328 = vpop.f32.mrf.mxu0
        %v329 = vadd.f32 %v255, %v328
        %v330 = vpop.f32.mrf.mxu0
        %331 = vmatprep.mubr.f32.mxu0 0.0
        %332 = vmatmul.mubr.f32.gmra.mxu0 %v228
        %v333 = vpop.f32.mrf.mxu0
        %v334 = vadd.f32 %v255, %v333
        %v335 = vpop.f32.mrf.mxu0
        %336 = vmatprep.mubr.f32.mxu0 0.0
        %337 = vmatmul.mubr.f32.gmra.mxu0 %v229
        %v338 = vpop.f32.mrf.mxu0
        %v339 = vadd.f32 %v255, %v338
        %v340 = vpop.f32.mrf.mxu0
        %341 = vmatprep.mubr.f32.mxu0 0.0
        %342 = vmatmul.mubr.f32.gmra.mxu0 %v230
        %v343 = vpop.f32.mrf.mxu0
        %v344 = vadd.f32 %v255, %v343
        %v345 = vpop.f32.mrf.mxu0
        %346 = vmatprep.mubr.f32.mxu0 0.0
        %347 = vmatmul.mubr.f32.gmra.mxu0 %v231
        %v348 = vpop.f32.mrf.mxu0
        %v349 = vadd.f32 %v255, %v348
        %v350 = vpop.f32.mrf.mxu0
        %351 = vmatprep.mubr.f32.mxu0 0.0
        %352 = vmatmul.mubr.f32.gmra.mxu0 %v232
        %v353 = vpop.f32.mrf.mxu0
        %v354 = vadd.f32 %v255, %v353
        %v355 = vpop.f32.mrf.mxu0
        %356 = vmatprep.mubr.f32.mxu0 0.0
        %357 = vmatmul.mubr.f32.gmra.mxu0 %v233
        %v358 = vpop.f32.mrf.mxu0
        %v359 = vadd.f32 %v255, %v358
        %v360 = vpop.f32.mrf.mxu0
        %361 = vdwg.mxu0
        %v362 = vmax.f32 %v324, 0.0
        %v363 = vmax.f32 %v329, 0.0
        %v364 = vmax.f32 %v334, 0.0
        %v365 = vmax.f32 %v339, 0.0
        %v366 = vmax.f32 %v344, 0.0
        %v367 = vmax.f32 %v349, 0.0
        %v368 = vmax.f32 %v354, 0.0
        %v369 = vmax.f32 %v359, 0.0
        %v370 = vld [vmem:[%s3] sm:$0xff]
        %v371 = vld [vmem:[%s3 + $0x8] sm:$0xff]
        %v372 = vld [vmem:[%s4] sm:$0x1]
        %v374 = vlaneseq
        %v375 = vshrl.u32 %v374, 7
        %v376 = vsub.s32 0, %v375
        %v377 = vrot.slane %v372, %v376
        %vm379 = vcmask 130048
        %v381 = vsel %vm379, %v362, 0
        %v384 = vsel %vm379, %v363, 0
        %v387 = vsel %vm379, %v364, 0
        %v390 = vsel %vm379, %v365, 0
        %v393 = vsel %vm379, %v366, 0
        %v396 = vsel %vm379, %v367, 0
        %v399 = vsel %vm379, %v368, 0
        %v402 = vsel %vm379, %v369, 0
        %404 = vmatprep.subr.mxu0 0.0
        %405 = vmatpush1.msra.mxu0 0.0
        %406 = vmatprep.subr.mxu0 0.0
        %407 = vmatpush1.msra.mxu0 0.0
        %408 = vmatprep.subr.mxu0 0.0
        %409 = vmatpush1.msra.mxu0 0.0
        %410 = vmatprep.subr.mxu0 0.0
        %411 = vmatpush1.msra.mxu0 0.0
        %412 = vmatprep.subr.mxu0 0.0
        %413 = vmatpush1.msra.mxu0 0.0
        %414 = vmatprep.subr.mxu0 0.0
        %415 = vmatpush1.msra.mxu0 0.0
        %416 = vmatprep.subr.mxu0 0.0
        %417 = vmatpush1.msra.mxu0 0.0
        %418 = vmatprep.subr.mxu0 0.0
        %419 = vmatpush1.msra.mxu0 0.0
        %420 = vmatprep.subr.mxu0 0.0
        %421 = vmatpush1.msra.mxu0 0.0
        %422 = vmatprep.subr.mxu0 0.0
        %423 = vmatpush1.msra.mxu0 0.0
        %424 = vmatprep.subr.mxu0 0.0
        %425 = vmatpush1.msra.mxu0 0.0
        %426 = vmatprep.subr.mxu0 0.0
        %427 = vmatpush1.msra.mxu0 0.0
        %428 = vmatprep.subr.mxu0 0.0
        %429 = vmatpush1.msra.mxu0 0.0
        %430 = vmatprep.subr.mxu0 0.0
        %431 = vmatpush1.msra.mxu0 0.0
        %432 = vmatprep.subr.mxu0 0.0
        %433 = vmatpush1.msra.mxu0 %v371
        %434 = vmatprep.subr.mxu0 0.0
        %435 = vmatpush1.msra.mxu0 %v370
        %436 = vmatprep.subr.mxu0 0.0
        %437 = vmatpush2.msra.mxu0 0.0
        %438 = vmatprep.subr.mxu0 0.0
        %439 = vmatpush2.msra.mxu0 0.0
        %440 = vmatprep.subr.mxu0 0.0
        %441 = vmatpush2.msra.mxu0 0.0
        %442 = vmatprep.subr.mxu0 0.0
        %443 = vmatpush2.msra.mxu0 0.0
        %444 = vmatprep.subr.mxu0 0.0
        %445 = vmatpush2.msra.mxu0 0.0
        %446 = vmatprep.subr.mxu0 0.0
        %447 = vmatpush2.msra.mxu0 0.0
        %448 = vmatprep.subr.mxu0 0.0
        %449 = vmatpush2.msra.mxu0 0.0
        %450 = vmatprep.subr.mxu0 0.0
        %451 = vmatpush2.msra.mxu0 0.0
        %452 = vmatprep.subr.mxu0 0.0
        %453 = vmatpush2.msra.mxu0 0.0
        %454 = vmatprep.subr.mxu0 0.0
        %455 = vmatpush2.msra.mxu0 0.0
        %456 = vmatprep.subr.mxu0 0.0
        %457 = vmatpush2.msra.mxu0 0.0
        %458 = vmatprep.subr.mxu0 0.0
        %459 = vmatpush2.msra.mxu0 0.0
        %460 = vmatprep.subr.mxu0 0.0
        %461 = vmatpush2.msra.mxu0 0.0
        %462 = vmatprep.subr.mxu0 0.0
        %463 = vmatpush2.msra.mxu0 0.0
        %464 = vmatprep.subr.mxu0 0.0
        %465 = vmatpush2.msra.mxu0 0.0
        %466 = vmatprep.subr.mxu0 0.0
        %467 = vmatpush2.msra.mxu0 0.0
        %468 = vmatprep.mubr.f32.mxu0 0.0
        %469 = vmatmul.mubr.f32.gmra.mxu0 %v381
        %v470 = vpop.f32.mrf.mxu0
        %v471 = vadd.f32 %v377, %v470
        %v472 = vpop.f32.mrf.mxu0
        %473 = vmatprep.mubr.f32.mxu0 0.0
        %474 = vmatmul.mubr.f32.gmra.mxu0 %v384
        %v475 = vpop.f32.mrf.mxu0
        %v476 = vadd.f32 %v377, %v475
        %v477 = vpop.f32.mrf.mxu0
        %478 = vmatprep.mubr.f32.mxu0 0.0
        %479 = vmatmul.mubr.f32.gmra.mxu0 %v387
        %v480 = vpop.f32.mrf.mxu0
        %v481 = vadd.f32 %v377, %v480
        %v482 = vpop.f32.mrf.mxu0
        %483 = vmatprep.mubr.f32.mxu0 0.0
        %484 = vmatmul.mubr.f32.gmra.mxu0 %v390
        %v485 = vpop.f32.mrf.mxu0
        %v486 = vadd.f32 %v377, %v485
        %v487 = vpop.f32.mrf.mxu0
        %488 = vmatprep.mubr.f32.mxu0 0.0
        %489 = vmatmul.mubr.f32.gmra.mxu0 %v393
        %v490 = vpop.f32.mrf.mxu0
        %v491 = vadd.f32 %v377, %v490
        %v492 = vpop.f32.mrf.mxu0
        %493 = vmatprep.mubr.f32.mxu0 0.0
        %494 = vmatmul.mubr.f32.gmra.mxu0 %v396
        %v495 = vpop.f32.mrf.mxu0
        %v496 = vadd.f32 %v377, %v495
        %v497 = vpop.f32.mrf.mxu0
        %498 = vmatprep.mubr.f32.mxu0 0.0
        %499 = vmatmul.mubr.f32.gmra.mxu0 %v399
        %v500 = vpop.f32.mrf.mxu0
        %v501 = vadd.f32 %v377, %v500
        %v502 = vpop.f32.mrf.mxu0
        %503 = vmatprep.mubr.f32.mxu0 0.0
        %504 = vmatmul.mubr.f32.gmra.mxu0 %v402
        %v505 = vpop.f32.mrf.mxu0
        %v506 = vadd.f32 %v377, %v505
        %v507 = vpop.f32.mrf.mxu0
        %508 = vdwg.mxu0
        %v509 = vxor.u32 %v471, 2147483648
        %v510 = vxor.u32 %v476, 2147483648
        %v511 = vxor.u32 %v481, 2147483648
        %v512 = vxor.u32 %v486, 2147483648
        %v513 = vxor.u32 %v491, 2147483648
        %v514 = vxor.u32 %v496, 2147483648
        %v515 = vxor.u32 %v501, 2147483648
        %v516 = vxor.u32 %v506, 2147483648
        %v517 = vmul.f32 %v509, 1.442695
        %v518 = vpow.pop %v517
        %v519 = vmul.f32 %v510, 1.442695
        %v520 = vpow.pop %v519
        %v521 = vmul.f32 %v511, 1.442695
        %v522 = vpow.pop %v521
        %v523 = vmul.f32 %v512, 1.442695
        %v524 = vpow.pop %v523
        %v525 = vmul.f32 %v513, 1.442695
        %v526 = vpow.pop %v525
        %v527 = vmul.f32 %v514, 1.442695
        %v528 = vpow.pop %v527
        %v529 = vmul.f32 %v515, 1.442695
        %v530 = vpow.pop %v529
        %v531 = vmul.f32 %v516, 1.442695
        %v532 = vpow.pop %v531
        %v533 = vadd.f32 %v518, 1.0
        %v534 = vadd.f32 %v520, 1.0
        %v535 = vadd.f32 %v522, 1.0
        %v536 = vadd.f32 %v524, 1.0
        %v537 = vadd.f32 %v526, 1.0
        %v538 = vadd.f32 %v528, 1.0
        %v539 = vadd.f32 %v530, 1.0
        %v540 = vadd.f32 %v532, 1.0
        %v541 = vrcp.pop %v533
        %v542 = vmul.f32 1.0, %v541
        %v543 = vrcp.pop %v534
        %v544 = vmul.f32 1.0, %v543
        %v545 = vrcp.pop %v535
        %v546 = vmul.f32 1.0, %v545
        %v547 = vrcp.pop %v536
        %v548 = vmul.f32 1.0, %v547
        %v549 = vrcp.pop %v537
        %v550 = vmul.f32 1.0, %v549
        %v551 = vrcp.pop %v538
        %v552 = vmul.f32 1.0, %v551
        %v553 = vrcp.pop %v539
        %v554 = vmul.f32 1.0, %v553
        %v555 = vrcp.pop %v540
        %v556 = vmul.f32 1.0, %v555
        %v557 = vmul.f32 %v226, %v542
        %v558 = vmul.f32 %v227, %v544
        %v559 = vmul.f32 %v228, %v546
        %v560 = vmul.f32 %v229, %v548
        %v561 = vmul.f32 %v230, %v550
        %v562 = vmul.f32 %v231, %v552
        %v563 = vmul.f32 %v232, %v554
        %v564 = vmul.f32 %v233, %v556
        %565 = vst [vmem:[%s218] sm:$0xff] %v557
        %566 = vst [vmem:[%s218 + $0x8] sm:$0xff] %v558
        %567 = vst [vmem:[%s218 + $0x10] sm:$0xff] %v559
        %568 = vst [vmem:[%s218 + $0x18] sm:$0xff] %v560
        %569 = vst [vmem:[%s218 + $0x20] sm:$0xff] %v561
        %570 = vst [vmem:[%s218 + $0x28] sm:$0xff] %v562
        %571 = vst [vmem:[%s218 + $0x30] sm:$0xff] %v563
        %572 = vst [vmem:[%s218 + $0x38] sm:$0xff] %v564
        %s573 = sand.u32 %s137, 1
        %s574 = scalar_lea.sflag [#allocation3], %s573
        %s575 = sand.u32 %s137, 1
        %s576 = smul.addr %s575, 64
        %s577 = scalar_lea.vmem [#allocation2], %s576
        // Predicated region
        $region41: #{tpu_custom_call.1} parent=39 // pred_check
          %p578 = pneg %p147
        $region42: #{tpu_custom_call.1} parent=39 // pred_check_branch
          %580 = sbr.rel (%p578) target = $region44
        $region43: #{tpu_custom_call.1} parent=39 // pred_region
          %s581 = smul.u32 8, %s19
          %s583 = ssub.s32 1024, 1024
          %584 = vsyncadd %s574, %s583
          %s585 = smul.addr %s581, 128
          %s586 = scalar_lea.hbm %s5, %s585
          %s587 = sshll.u32 %s577, 4
          %s588 = int_to_ptr.vmem [resolvable:$true] %s587
          %593 = dma.vmem_to_hbm [thread:$0]  %s588, 1024, %s586, %s574, 128, 128, 8
        $region44: #{tpu_custom_call.1} parent=39 // pred_fallthru
          _
      $region40: #{tpu_custom_call.1} parent=5 // pred_fallthru
        _
      %p594 = scmp.le.s32.totalorder 2, %s14
      // Predicated region
      $region45: #{tpu_custom_call.1} parent=5 // pred_check
        %p595 = pneg %p594
      $region46: #{tpu_custom_call.1} parent=5 // pred_check_branch
        %597 = sbr.rel (%p595) target = $region48
      $region47: #{tpu_custom_call.1} parent=5 // pred_region
        %s598 = ssub.s32 %s14, 2
        // Predicated region
        $region49: #{tpu_custom_call.1} parent=47 // pred_check
          %p599 = pneg %p153
        $region50: #{tpu_custom_call.1} parent=47 // pred_check_branch
          %601 = sbr.rel (%p599) target = $region52
        $region51: #{tpu_custom_call.1} parent=47 // pred_region
          %s602 = sand.u32 %s138, 1
          %s603 = scalar_lea.sflag [#allocation3], %s602
          %s604 = sand.u32 %s138, 1
          %s605 = smul.addr %s604, 64
          %s606 = scalar_lea.vmem [#allocation2], %s605
          %607 = dma.done %s603, 1024
        $region52: #{tpu_custom_call.1} parent=47 // pred_fallthru
          _
      $region48: #{tpu_custom_call.1} parent=5 // pred_fallthru
        _
    $region6: #{tpu_custom_call.1} parent=1 // loop_footer
      %s18 = sadd.s32 1, %s14
    $region7: #{tpu_custom_call.1} parent=1 // loop_footer_branch
      %13 = sbr.rel target = $region3
    $region8: #{tpu_custom_call.1} parent=1 // loop_exit
      _
    %608 = vsyncpa [#allocation3], 1
    %s609 = scalar_lea.sflag [#allocation3], 1
    %610 = vsyncpa %s609, 1

</llo_original>
